<compile_context>
chip_gen: v5e
topology: v5e:2x2
jax: 0.10.0
libtpu: 0.0.40
codegen_flags: <defaults>
</compile_context>

<pallas_src>
import functools

import jax
import jax.numpy as jnp
from jax.experimental import pallas as pl
from jax.experimental.pallas import tpu as pltpu


def cross_attention_kernel(pm_ref, w_ref, b_ref, pep_ref, mhc_ref, out_ref,
                           *, n_heads, hidden_size):
    B, L, H = pep_ref.shape            # static block shape (= full arrays)
    nhh = n_heads * hidden_size        # 128: one full lane width
    BL = B * L                         # 16: sublane-aligned row split

    # --- Fused projections: one (2·B·L, H) @ (H, 2·NH·H) bf16 MXU pass. ---
    proj = jnp.dot(pm_ref[...], w_ref[...],
                   preferred_element_type=jnp.float32)        # (2BL, 2*nhh) f32
    proj = proj + b_ref[...]                                   # [b_pep | b_mhc]

    # Valid quadrants: peptide rows x W_pep cols, mhc rows x W_mhc cols.
    # Row split at BL=16 (multiple of 8), column split at nhh=128 (lane width).
    pep_s = proj[:BL, :nhh].reshape(B, L, nhh)                 # (B, L, 128)
    mhc_s = proj[BL:, nhh:].reshape(B, L, nhh)                 # (B, L, 128)

    # --- Scores: contraction over the concatenated NH*H axis == sum over  ---
    # --- heads of per-head dots; / hidden_size then mean over heads.      ---
    scores = jnp.einsum('bpk,bmk->bpm',
                        pep_s.astype(jnp.bfloat16),
                        mhc_s.astype(jnp.bfloat16),
                        preferred_element_type=jnp.float32)    # (B, Lp, Lm)
    scores = scores * (1.0 / (hidden_size * n_heads))

    # --- Softmax over the *flattened* (Lp·Lm) score map, exactly as the    ---
    # --- module does — implemented as max/sum over both seq axes, f32.     ---
    m = jnp.max(jnp.max(scores, axis=2, keepdims=True), axis=1, keepdims=True)
    e = jnp.exp(scores - m)
    denom = jnp.sum(jnp.sum(e, axis=2, keepdims=True), axis=1, keepdims=True)
    att = e / denom                                            # exact divide

    # output[b] = sum_{i,j} (peptide[b,j,:] + mhc[b,i,:]) * att[b,i,j]
    #   weight on peptide rows = att summed over its peptide axis (axis 1)
    #   weight on mhc rows     = att summed over its mhc axis     (axis 2)
    w_pep = jnp.sum(att, axis=1)                               # (B, L)
    w_mhc = jnp.sum(att, axis=2)                               # (B, L)

    pep = pep_ref[...]                                         # (B, L, H) f32
    mhc = mhc_ref[...]                                         # (B, L, H) f32
    out = jnp.sum(pep * w_pep[:, :, None] + mhc * w_mhc[:, :, None], axis=1)
    out_ref[...] = out.astype(out_ref.dtype)                   # (B, H)


def cross_attention(peptide, mhc, wp_cat, bp_cat, wm_cat, bm_cat,
                    *, n_heads, hidden_size):
    B, Lp, H = peptide.shape
    Bm, Lm, Hm = mhc.shape
    assert (B, H) == (Bm, Hm)
    assert Lp == Lm, "PyTorch broadcast in the reference forward requires Lp == Lm"
    assert H == hidden_size
    nhh = n_heads * hidden_size
    assert wp_cat.shape == (H, nhh) and wm_cat.shape == (H, nhh)
    assert bp_cat.shape == (1, nhh) and bm_cat.shape == (1, nhh)

    # Wrapper-side layout plumbing (not compute hoisting):
    #   * row-stack peptide & mhc into one bf16 MXU operand (2·B·L, H)
    #   * column-concat the two head-concatenated weights to (H, 2·NH·H = 256)
    #   * biases stay f32 (added after the f32-accumulated matmul)
    pm = jnp.concatenate(
        [peptide.reshape(B * Lp, H), mhc.reshape(B * Lm, H)], axis=0
    ).astype(jnp.bfloat16)                                      # (2·B·L, H)
    w = jnp.concatenate([wp_cat, wm_cat], axis=1).astype(jnp.bfloat16)  # (H, 256)
    b = jnp.concatenate([bp_cat, bm_cat], axis=1).astype(jnp.float32)   # (1, 256)

    kernel = functools.partial(cross_attention_kernel,
                               n_heads=n_heads, hidden_size=hidden_size)

    # Single grid step: every block is the full array (so the (8,128) tiling
    # constraint never triggers) and there is no per-step pipeline overhead.
    # VMEM footprint is ~tens of KB — far below the scoped limit on any chip.
    out = pl.pallas_call(
        kernel,
        out_shape=jax.ShapeDtypeStruct((B, H), jnp.float32),
        grid=(1,),
        in_specs=[
            pl.BlockSpec((2 * B * Lp, H), lambda i: (0, 0)),    # stacked inputs (bf16)
            pl.BlockSpec((H, 2 * nhh), lambda i: (0, 0)),       # [W_pep | W_mhc]
            pl.BlockSpec((1, 2 * nhh), lambda i: (0, 0)),       # [b_pep | b_mhc]
            pl.BlockSpec((B, Lp, H), lambda i: (0, 0, 0)),      # peptide (f32)
            pl.BlockSpec((B, Lm, H), lambda i: (0, 0, 0)),      # mhc (f32)
        ],
        out_specs=pl.BlockSpec((B, H), lambda i: (0, 0)),
    )(pm, w, b, peptide, mhc)
    return out


def make_params(key, hidden_size, n_heads):
    """Deterministic synthetic params matching the module's __init__ shapes."""
    out_f = hidden_size * n_heads
    k1, k2, k3, k4 = jax.random.split(key, 4)
    bound_w = (6.0 / (hidden_size + out_f)) ** 0.5              # xavier_uniform
    W_mhc = jax.random.uniform(k1, (out_f, hidden_size), jnp.float32, -bound_w, bound_w)
    W_pep = jax.random.uniform(k2, (out_f, hidden_size), jnp.float32, -bound_w, bound_w)
    bound_b = 1.0 / (hidden_size ** 0.5)                        # nn.Linear default bias init
    b_mhc = jax.random.uniform(k3, (out_f,), jnp.float32, -bound_b, bound_b)
    b_pep = jax.random.uniform(k4, (out_f,), jnp.float32, -bound_b, bound_b)
    return W_pep, b_pep, W_mhc, b_mhc


def reference_forward(peptide, mhc, W_pep, b_pep, W_mhc, b_mhc, n_heads, H):
    """Pure-JAX (f32) transcription of the PyTorch forward, for verification."""
    B, Lp, _ = peptide.shape
    Lm = mhc.shape[1]
    mhc_s = (mhc @ W_mhc.T + b_mhc).reshape(B, Lm, n_heads, H).transpose(0, 2, 1, 3)
    pep_s = (peptide @ W_pep.T + b_pep).reshape(B, Lp, n_heads, H).transpose(0, 2, 1, 3)
    scores = jnp.einsum('bhpd,bhmd->bhpm', pep_s, mhc_s) / H
    scores = scores.mean(axis=1)                                 # (B, Lp, Lm)
    att = jax.nn.softmax(scores.reshape(B, -1), axis=1).reshape(B, Lp, Lm, 1)
    intermap = peptide[:, None, :, :] + mhc[:, :, None, :]       # (B, Lm, Lp, H)
    return jnp.sum(intermap * att, axis=(1, 2))                  # (B, H)


if __name__ == "__main__":
    B, L, H, NH = 2, 8, 32, 4

    key = jax.random.PRNGKey(0)
    kp, km, kw = jax.random.split(key, 3)
    peptide = jax.random.normal(kp, (B, L, H), jnp.float32)
    mhc = jax.random.normal(km, (B, L, H), jnp.float32)
    W_pep, b_pep, W_mhc, b_mhc = make_params(kw, H, NH)

    # Torch Linear computes x @ W.T + b, so the head-concatenated kernel weight
    # is simply W.T with shape (H, NH*H); columns [h*H:(h+1)*H] belong to head h.
    wp_cat = W_pep.T                        # (H, NH*H)
    wm_cat = W_mhc.T                        # (H, NH*H)
    bp_cat = b_pep.reshape(1, NH * H)
    bm_cat = b_mhc.reshape(1, NH * H)

    out = cross_attention(peptide, mhc, wp_cat, bp_cat, wm_cat, bm_cat,
                          n_heads=NH, hidden_size=H)
    out = jax.block_until_ready(out)

    ref = reference_forward(peptide, mhc, W_pep, b_pep, W_mhc, b_mhc, NH, H)
    assert out.shape == (B, H)
    # bf16 MXU operands (f32 accumulation) vs the pure-f32 reference: expect
    # ~1e-3 relative error; 1e-2 tolerance gives comfortable margin.
    assert jnp.allclose(out, ref, atol=1e-2, rtol=1e-2), "mismatch vs JAX reference"

    print("KERNEL_OK")
</pallas_src>

<mosaic_0001>
module attributes {stable_mosaic.version = 11 : i64} {
  func.func @cross_attention_kernel(%arg0: i32, %arg1: memref<32x32xbf16, #tpu.memory_space<vmem>>, %arg2: memref<32x256xbf16, #tpu.memory_space<vmem>>, %arg3: memref<1x256xf32, #tpu.memory_space<vmem>>, %arg4: memref<2x8x32xf32, #tpu.memory_space<vmem>>, %arg5: memref<2x8x32xf32, #tpu.memory_space<vmem>>, %arg6: memref<2x32xf32, #tpu.memory_space<vmem>>) attributes {dimension_semantics = [#tpu.dimension_semantics<arbitrary>], iteration_bounds = array<i64: 1>, scalar_prefetch = 0 : i64, scratch_operands = 0 : i64, tpu.core_type = #tpu.core_type<tc>, window_params = [{pipeline_mode = #tpu.pipeline_mode<synchronous>, transform_indices = @transform_0, window_bounds = array<i64: 32, 32>}, {pipeline_mode = #tpu.pipeline_mode<synchronous>, transform_indices = @transform_1, window_bounds = array<i64: 32, 256>}, {pipeline_mode = #tpu.pipeline_mode<synchronous>, transform_indices = @transform_2, window_bounds = array<i64: 1, 256>}, {pipeline_mode = #tpu.pipeline_mode<synchronous>, transform_indices = @transform_3, window_bounds = array<i64: 2, 8, 32>}, {pipeline_mode = #tpu.pipeline_mode<synchronous>, transform_indices = @transform_4, window_bounds = array<i64: 2, 8, 32>}, {pipeline_mode = #tpu.pipeline_mode<synchronous>, transform_indices = @transform_5, window_bounds = array<i64: 2, 32>}]} {
    %c0 = arith.constant 0 : index
    %c0_0 = arith.constant 0 : index
    %0 = vector.load %arg1[%c0, %c0_0] : memref<32x32xbf16, #tpu.memory_space<vmem>>, vector<32x32xbf16>
    %c0_1 = arith.constant 0 : index
    %c0_2 = arith.constant 0 : index
    %1 = vector.load %arg2[%c0_1, %c0_2] : memref<32x256xbf16, #tpu.memory_space<vmem>>, vector<32x256xbf16>
    %cst = arith.constant dense<0.000000e+00> : vector<32x256xf32>
    %2 = tpu.matmul %0, %1, %cst {dimension_numbers = #tpu.dot_dimension_numbers<[1], [0], [0], [1], [0, 0, 1, 1], [], []>} : vector<32x32xbf16>, vector<32x256xbf16>, vector<32x256xf32> -> vector<32x256xf32>
    %c0_3 = arith.constant 0 : index
    %c0_4 = arith.constant 0 : index
    %3 = vector.load %arg3[%c0_3, %c0_4] : memref<1x256xf32, #tpu.memory_space<vmem>>, vector<1x256xf32>
    %4 = vector.broadcast %3 : vector<1x256xf32> to vector<32x256xf32>
    %5 = arith.addf %2, %4 : vector<32x256xf32>
    %6 = vector.extract_strided_slice %5 {offsets = [0, 0], sizes = [16, 128], strides = [1, 1]} : vector<32x256xf32> to vector<16x128xf32>
    %7 = vector.shape_cast %6 : vector<16x128xf32> to vector<2x8x128xf32>
    %8 = vector.extract_strided_slice %5 {offsets = [16, 128], sizes = [16, 128], strides = [1, 1]} : vector<32x256xf32> to vector<16x128xf32>
    %9 = vector.shape_cast %8 : vector<16x128xf32> to vector<2x8x128xf32>
    %10 = arith.truncf %7 : vector<2x8x128xf32> to vector<2x8x128xbf16>
    %11 = arith.truncf %9 : vector<2x8x128xf32> to vector<2x8x128xbf16>
    "tpu.trace_start"() <{level = 10 : i32, message = "bpk,bmk->bpm"}> : () -> ()
    %cst_5 = arith.constant dense<0.000000e+00> : vector<2x8x8xf32>
    %12 = tpu.matmul %10, %11, %cst_5 {dimension_numbers = #tpu.dot_dimension_numbers<[2], [2], [1], [1], [0, 0, 0, 1, 1, 1], [0], [0]>} : vector<2x8x128xbf16>, vector<2x8x128xbf16>, vector<2x8x8xf32> -> vector<2x8x8xf32>
    "tpu.trace_stop"() : () -> ()
    %cst_6 = arith.constant 7.812500e-03 : f32
    %13 = vector.broadcast %cst_6 : f32 to vector<2x8x8xf32>
    %14 = arith.mulf %12, %13 : vector<2x8x8xf32>
    %cst_7 = arith.constant dense<0xFF800000> : vector<2x8xf32>
    %15 = vector.multi_reduction <maximumf>, %14, %cst_7 [2] : vector<2x8x8xf32> to vector<2x8xf32>
    %16 = vector.shape_cast %15 : vector<2x8xf32> to vector<2x8x1xf32>
    %cst_8 = arith.constant dense<0xFF800000> : vector<2x1xf32>
    %17 = vector.multi_reduction <maximumf>, %16, %cst_8 [1] : vector<2x8x1xf32> to vector<2x1xf32>
    %18 = vector.shape_cast %17 : vector<2x1xf32> to vector<2x1x1xf32>
    %19 = vector.broadcast %18 : vector<2x1x1xf32> to vector<2x8x8xf32>
    %20 = arith.subf %14, %19 : vector<2x8x8xf32>
    %21 = math.exp %20 : vector<2x8x8xf32>
    %cst_9 = arith.constant dense<0.000000e+00> : vector<2x8xf32>
    %22 = vector.multi_reduction <add>, %21, %cst_9 [2] : vector<2x8x8xf32> to vector<2x8xf32>
    %23 = vector.shape_cast %22 : vector<2x8xf32> to vector<2x8x1xf32>
    %cst_10 = arith.constant dense<0.000000e+00> : vector<2x1xf32>
    %24 = vector.multi_reduction <add>, %23, %cst_10 [1] : vector<2x8x1xf32> to vector<2x1xf32>
    %25 = vector.shape_cast %24 : vector<2x1xf32> to vector<2x1x1xf32>
    %26 = vector.broadcast %25 : vector<2x1x1xf32> to vector<2x8x8xf32>
    %27 = arith.divf %21, %26 : vector<2x8x8xf32>
    %cst_11 = arith.constant dense<0.000000e+00> : vector<2x8xf32>
    %28 = vector.multi_reduction <add>, %27, %cst_11 [1] : vector<2x8x8xf32> to vector<2x8xf32>
    %cst_12 = arith.constant dense<0.000000e+00> : vector<2x8xf32>
    %29 = vector.multi_reduction <add>, %27, %cst_12 [2] : vector<2x8x8xf32> to vector<2x8xf32>
    %c0_13 = arith.constant 0 : index
    %c0_14 = arith.constant 0 : index
    %c0_15 = arith.constant 0 : index
    %30 = vector.load %arg4[%c0_13, %c0_14, %c0_15] : memref<2x8x32xf32, #tpu.memory_space<vmem>>, vector<2x8x32xf32>
    %c0_16 = arith.constant 0 : index
    %c0_17 = arith.constant 0 : index
    %c0_18 = arith.constant 0 : index
    %31 = vector.load %arg5[%c0_16, %c0_17, %c0_18] : memref<2x8x32xf32, #tpu.memory_space<vmem>>, vector<2x8x32xf32>
    %32 = vector.shape_cast %28 : vector<2x8xf32> to vector<2x8x1xf32>
    %33 = vector.broadcast %32 : vector<2x8x1xf32> to vector<2x8x32xf32>
    %34 = arith.mulf %30, %33 : vector<2x8x32xf32>
    %35 = vector.shape_cast %29 : vector<2x8xf32> to vector<2x8x1xf32>
    %36 = vector.broadcast %35 : vector<2x8x1xf32> to vector<2x8x32xf32>
    %37 = arith.mulf %31, %36 : vector<2x8x32xf32>
    %38 = arith.addf %34, %37 : vector<2x8x32xf32>
    %cst_19 = arith.constant dense<0.000000e+00> : vector<2x32xf32>
    %39 = vector.multi_reduction <add>, %38, %cst_19 [1] : vector<2x8x32xf32> to vector<2x32xf32>
    %c0_20 = arith.constant 0 : index
    %c0_21 = arith.constant 0 : index
    %40 = vector.load %arg6[%c0_20, %c0_21] : memref<2x32xf32, #tpu.memory_space<vmem>>, vector<2x32xf32>
    tpu.vector_store %arg6[%c0_20, %c0_21], %39 {strides = array<i32>} : memref<2x32xf32, #tpu.memory_space<vmem>>, vector<2x32xf32>,
    return
  }
  func.func @transform_0(%arg0: i32) -> (i32, i32) {
    %c0_i32 = arith.constant 0 : i32
    %c0_i32_0 = arith.constant 0 : i32
    %c0_i32_1 = arith.constant 0 : i32
    return %c0_i32, %c0_i32_0 : i32, i32
  }
  func.func @transform_1(%arg0: i32) -> (i32, i32) {
    %c0_i32 = arith.constant 0 : i32
    %c0_i32_0 = arith.constant 0 : i32
    %c0_i32_1 = arith.constant 0 : i32
    return %c0_i32, %c0_i32_0 : i32, i32
  }
  func.func @transform_2(%arg0: i32) -> (i32, i32) {
    %c0_i32 = arith.constant 0 : i32
    %c0_i32_0 = arith.constant 0 : i32
    %c0_i32_1 = arith.constant 0 : i32
    return %c0_i32, %c0_i32_0 : i32, i32
  }
  func.func @transform_3(%arg0: i32) -> (i32, i32, i32) {
    %c0_i32 = arith.constant 0 : i32
    %c0_i32_0 = arith.constant 0 : i32
    %c0_i32_1 = arith.constant 0 : i32
    %c0_i32_2 = arith.constant 0 : i32
    return %c0_i32, %c0_i32_0, %c0_i32_1 : i32, i32, i32
  }
  func.func @transform_4(%arg0: i32) -> (i32, i32, i32) {
    %c0_i32 = arith.constant 0 : i32
    %c0_i32_0 = arith.constant 0 : i32
    %c0_i32_1 = arith.constant 0 : i32
    %c0_i32_2 = arith.constant 0 : i32
    return %c0_i32, %c0_i32_0, %c0_i32_1 : i32, i32, i32
  }
  func.func @transform_5(%arg0: i32) -> (i32, i32) {
    %c0_i32 = arith.constant 0 : i32
    %c0_i32_0 = arith.constant 0 : i32
    %c0_i32_1 = arith.constant 0 : i32
    return %c0_i32, %c0_i32_0 : i32, i32
  }
}

</mosaic_0001>

<llo_original>
// kernel: tpu_custom_call.1
$region0: #{tpu_custom_call.1}
  #allocation0 [shape = 'u32[]', space=smem, size = 0x4, offset = 0x4, fixed_abs, tag = 'smem constant byte address 0x4 - core index']
  #allocation1 [shape = 'u32[72,128]{1,0:T(1,128)}', space=vmem, size = 0x9000, scoped, tag = 'internal scratch']
  %s0 = inlined_call_operand.hbm [shape: bf16[32,32], index: 0, kind: input, shape index: {}]
  %s1 = inlined_call_operand.hbm [shape: bf16[32,256], index: 1, kind: input, shape index: {}]
  %s2 = inlined_call_operand.hbm [shape: f32[1,256], index: 2, kind: input, shape index: {}]
  %s3 = inlined_call_operand.hbm [shape: f32[2,8,32], index: 3, kind: input, shape index: {}]
  %s4 = inlined_call_operand.hbm [shape: f32[2,8,32], index: 4, kind: input, shape index: {}]
  %s5 = inlined_call_operand.hbm [shape: f32[2,32], index: 5, kind: output, shape index: {}]
  %s6 = sld [smem:[#allocation0]]
  $region50: #{tpu_custom_call.1} parent=0
    _
  %s8 = ssub.s32 1, %s6
  %s9 = scalar_select 0, %s8, %s6
  $region1: #{tpu_custom_call.1} parent=0
    #allocation2 [shape = 'u8[8192]{0}', space=vmem, size = 0x2000, scoped, tag = 'input window, operand 0, single buffered']
    #allocation3 [shape = 's32[1]{0}', space=sflag, size = 0x4, scoped, tag = 'scoped memory for tpu_custom_call.1']
    #allocation4 [shape = 's32[1]{0}', space=sflag, size = 0x4, scoped, tag = 'scoped memory for tpu_custom_call.1']
    #allocation5 [shape = 'u8[16384]{0}', space=vmem, size = 0x4000, scoped, tag = 'input window, operand 1, single buffered']
    #allocation6 [shape = 's32[1]{0}', space=sflag, size = 0x4, scoped, tag = 'scoped memory for tpu_custom_call.1']
    #allocation7 [shape = 'u8[1024]{0}', space=vmem, size = 0x400, scoped, tag = 'input window, operand 2, single buffered']
    #allocation8 [shape = 'u8[8192]{0}', space=vmem, size = 0x2000, scoped, tag = 'input window, operand 3, single buffered']
    #allocation9 [shape = 's32[1]{0}', space=sflag, size = 0x4, scoped, tag = 'scoped memory for tpu_custom_call.1']
    #allocation10 [shape = 'u8[8192]{0}', space=vmem, size = 0x2000, scoped, tag = 'input window, operand 4, single buffered']
    #allocation11 [shape = 'u8[1024]{0}', space=vmem, size = 0x400, scoped, tag = 'output window, operand 0, single buffered']
    %10 = vsyncpa [#allocation3], 0
    %11 = vsyncpa [#allocation6], 0
    %12 = vsyncpa [#allocation9], 0
    %13 = vsyncpa [#allocation4], 0
    // Predicated region
    $region2: #{tpu_custom_call.1} parent=1 // pred_check
      _
    $region3: #{tpu_custom_call.1} parent=1 // pred_check_branch
      %15 = sbr.rel (0) target = $region5
    $region4: #{tpu_custom_call.1} parent=1 // pred_region
      %17 = vsyncadd [#allocation3], 0
      %s18 = sshll.u32 %s0, 4
      %s19 = int_to_ptr.hbm [resolvable:$true] %s18
      %s20 = sshll.u32 [#allocation2], 4
      %s21 = int_to_ptr.vmem [resolvable:$true] %s20
      %26 = dma.hbm_to_vmem [thread:$0]  %s19, 256, %s21, [#allocation3], 64, 64, 4
    $region5: #{tpu_custom_call.1} parent=1 // pred_fallthru
      _
    // Predicated region
    $region6: #{tpu_custom_call.1} parent=1 // pred_check
      _
    $region7: #{tpu_custom_call.1} parent=1 // pred_check_branch
      %28 = sbr.rel (0) target = $region9
    $region8: #{tpu_custom_call.1} parent=1 // pred_region
      %30 = vsyncadd [#allocation6], 0
      %s31 = sshll.u32 %s1, 4
      %s32 = int_to_ptr.hbm [resolvable:$true] %s31
      %s33 = sshll.u32 [#allocation5], 4
      %s34 = int_to_ptr.vmem [resolvable:$true] %s33
      %39 = dma.hbm_to_vmem [thread:$0]  %s32, 512, %s34, [#allocation6], 128, 128, 8
    $region9: #{tpu_custom_call.1} parent=1 // pred_fallthru
      _
    // Predicated region
    $region10: #{tpu_custom_call.1} parent=1 // pred_check
      _
    $region11: #{tpu_custom_call.1} parent=1 // pred_check_branch
      %41 = sbr.rel (0) target = $region13
    $region12: #{tpu_custom_call.1} parent=1 // pred_region
      %43 = vsyncadd [#allocation6], 0
      %s45 = sshll.u32 %s2, 4
      %s46 = int_to_ptr.hbm [resolvable:$true] %s45
      %s47 = sshll.u32 [#allocation7], 4
      %s48 = int_to_ptr.vmem [resolvable:$true] %s47
      %50 = dma.hbm_to_vmem [thread:$0]  %s46, 32, %s48, [#allocation6]
    $region13: #{tpu_custom_call.1} parent=1 // pred_fallthru
      _
    // Predicated region
    $region14: #{tpu_custom_call.1} parent=1 // pred_check
      _
    $region15: #{tpu_custom_call.1} parent=1 // pred_check_branch
      %52 = sbr.rel (0) target = $region17
    $region16: #{tpu_custom_call.1} parent=1 // pred_region
      %54 = vsyncadd [#allocation9], 0
      %s55 = sshll.u32 %s3, 4
      %s56 = int_to_ptr.hbm [resolvable:$true] %s55
      %s57 = sshll.u32 [#allocation8], 4
      %s58 = int_to_ptr.vmem [resolvable:$true] %s57
      %63 = dma.hbm_to_vmem [thread:$0]  %s56, 256, %s58, [#allocation9], 128, 128, 8
    $region17: #{tpu_custom_call.1} parent=1 // pred_fallthru
      _
    // Predicated region
    $region18: #{tpu_custom_call.1} parent=1 // pred_check
      _
    $region19: #{tpu_custom_call.1} parent=1 // pred_check_branch
      %65 = sbr.rel (0) target = $region21
    $region20: #{tpu_custom_call.1} parent=1 // pred_region
      %67 = vsyncadd [#allocation9], 0
      %s68 = sshll.u32 %s4, 4
      %s69 = int_to_ptr.hbm [resolvable:$true] %s68
      %s70 = sshll.u32 [#allocation10], 4
      %s71 = int_to_ptr.vmem [resolvable:$true] %s70
      %76 = dma.hbm_to_vmem [thread:$0]  %s69, 256, %s71, [#allocation9], 128, 128, 8
    $region21: #{tpu_custom_call.1} parent=1 // pred_fallthru
      _
    // Predicated region
    $region22: #{tpu_custom_call.1} parent=1 // pred_check
      _
    $region23: #{tpu_custom_call.1} parent=1 // pred_check_branch
      %78 = sbr.rel (0) target = $region25
    $region24: #{tpu_custom_call.1} parent=1 // pred_region
      %80 = dma.done [#allocation3], 256
    $region25: #{tpu_custom_call.1} parent=1 // pred_fallthru
      _
    // Predicated region
    $region26: #{tpu_custom_call.1} parent=1 // pred_check
      _
    $region27: #{tpu_custom_call.1} parent=1 // pred_check_branch
      %82 = sbr.rel (0) target = $region29
    $region28: #{tpu_custom_call.1} parent=1 // pred_region
      %84 = dma.done [#allocation6], 512
    $region29: #{tpu_custom_call.1} parent=1 // pred_fallthru
      _
    // Predicated region
    $region30: #{tpu_custom_call.1} parent=1 // pred_check
      _
    $region31: #{tpu_custom_call.1} parent=1 // pred_check_branch
      %86 = sbr.rel (0) target = $region33
    $region32: #{tpu_custom_call.1} parent=1 // pred_region
      %88 = dma.done [#allocation6], 32
    $region33: #{tpu_custom_call.1} parent=1 // pred_fallthru
      _
    // Predicated region
    $region34: #{tpu_custom_call.1} parent=1 // pred_check
      _
    $region35: #{tpu_custom_call.1} parent=1 // pred_check_branch
      %90 = sbr.rel (0) target = $region37
    $region36: #{tpu_custom_call.1} parent=1 // pred_region
      %92 = dma.done [#allocation9], 256
    $region37: #{tpu_custom_call.1} parent=1 // pred_fallthru
      _
    // Predicated region
    $region38: #{tpu_custom_call.1} parent=1 // pred_check
      _
    $region39: #{tpu_custom_call.1} parent=1 // pred_check_branch
      %94 = sbr.rel (0) target = $region41
    $region40: #{tpu_custom_call.1} parent=1 // pred_region
      %96 = dma.done [#allocation9], 256
    $region41: #{tpu_custom_call.1} parent=1 // pred_fallthru
      _
    %v98 = vld [vmem:[#allocation2] sm:$0xf]
    %v99 = vld [vmem:[#allocation2 + $0x4] sm:$0xf]
    %v100 = vld [vmem:[#allocation2 + $0x8] sm:$0xf]
    %v101 = vld [vmem:[#allocation2 + $0xc] sm:$0xf]
    %v102 = vld [vmem:[#allocation5] sm:$0xff]
    %v103 = vld [vmem:[#allocation5 + $0x8] sm:$0xff]
    %v104 = vld [vmem:[#allocation5 + $0x10] sm:$0xff]
    %v105 = vld [vmem:[#allocation5 + $0x18] sm:$0xff]
    %v106 = vld [vmem:[#allocation7] sm:$0x3]
    %v108 = vperm.slane %v106, 0
    %v109 = vperm.slane %v106, 1
    %v116 = vunpack.c.l.b16 %v98
    %v117 = vunpack.c.l.b16 %v99
    %v118 = vunpack.c.l.b16 %v100
    %v119 = vunpack.c.l.b16 %v101
    %v120 = vpack.c.b16 %v117, %v116
    %v121 = vpack.c.b16 %v119, %v118
    %v126 = vunpack.c.l.b16 %v102
    %v127 = vunpack.c.h.b16 %v102
    %v128 = vunpack.c.l.b16 %v103
    %v129 = vunpack.c.h.b16 %v103
    %v130 = vunpack.c.l.b16 %v104
    %v131 = vunpack.c.h.b16 %v104
    %v132 = vunpack.c.l.b16 %v105
    %v133 = vunpack.c.h.b16 %v105
    %v134 = vpack.c.b16 %v128, %v126
    %v135 = vpack.c.b16 %v129, %v127
    %v136 = vpack.c.b16 %v132, %v130
    %v137 = vpack.c.b16 %v133, %v131
    %vm142 = vcmask 261120
    %v144 = vsel %vm142, %v120, 0
    %v147 = vsel %vm142, %v121, 0
    %149 = vmatpush.bf16.msra.mxu0 0
    %150 = vmatpush.bf16.msra.mxu0 0
    %151 = vmatpush.bf16.msra.mxu0 0
    %152 = vmatpush.bf16.msra.mxu0 0
    %153 = vmatpush.bf16.msra.mxu0 0
    %154 = vmatpush.bf16.msra.mxu0 0
    %155 = vmatpush.bf16.msra.mxu0 %v136
    %156 = vmatpush.bf16.msra.mxu0 %v134
    %157 = vmatmul.bf16.gmra.mxu0 %v144
    %v158 = vpop.f32.mrf.mxu0
    %v159 = vadd.f32 %v108, %v158
    %v160 = vpop.f32.mrf.mxu0
    %v161 = vadd.f32 %v108, %v160
    %162 = vmatmul.bf16.gmra.mxu0 %v147
    %v163 = vpop.f32.mrf.mxu0
    %v164 = vpop.f32.mrf.mxu0
    %165 = vdwg.mxu0
    %166 = vmatpush.bf16.msra.mxu0 0
    %167 = vmatpush.bf16.msra.mxu0 0
    %168 = vmatpush.bf16.msra.mxu0 0
    %169 = vmatpush.bf16.msra.mxu0 0
    %170 = vmatpush.bf16.msra.mxu0 0
    %171 = vmatpush.bf16.msra.mxu0 0
    %172 = vmatpush.bf16.msra.mxu0 %v137
    %173 = vmatpush.bf16.msra.mxu0 %v135
    %174 = vmatmul.bf16.gmra.mxu0 %v144
    %v175 = vpop.f32.mrf.mxu0
    %v176 = vpop.f32.mrf.mxu0
    %177 = vmatmul.bf16.gmra.mxu0 %v147
    %v178 = vpop.f32.mrf.mxu0
    %v179 = vadd.f32 %v109, %v178
    %v180 = vpop.f32.mrf.mxu0
    %v181 = vadd.f32 %v109, %v180
    %182 = vdwg.mxu0
    %v183 = vpack.c.bf16 %v159, %v159
    %v184 = vpack.c.bf16 %v161, %v161
    %v185 = vpack.c.bf16 %v179, %v179
    %v186 = vpack.c.bf16 %v181, %v181
    %187 = vmatpush.bf16.xpose.msra.mxu0 0
    %188 = vmatpush.bf16.xpose.msra.mxu0 0
    %189 = vmatpush.bf16.xpose.msra.mxu0 0
    %190 = vmatpush.bf16.xpose.msra.mxu0 0
    %191 = vmatpush.bf16.xpose.msra.mxu0 0
    %192 = vmatpush.bf16.xpose.msra.mxu0 0
    %193 = vmatpush.bf16.xpose.msra.mxu0 0
    %194 = vmatpush.bf16.xpose.msra.mxu0 %v185
    %195 = vmatmul.bf16.gmra.mxu0 %v183
    %v196 = vpop.f32.mrf.mxu0
    %v197 = vadd.f32 0.0, %v196
    %v198 = vpop.f32.mrf.mxu0
    %199 = vdwg.mxu0
    %200 = vmatpush.bf16.xpose.msra.mxu0 0
    %201 = vmatpush.bf16.xpose.msra.mxu0 0
    %202 = vmatpush.bf16.xpose.msra.mxu0 0
    %203 = vmatpush.bf16.xpose.msra.mxu0 0
    %204 = vmatpush.bf16.xpose.msra.mxu0 0
    %205 = vmatpush.bf16.xpose.msra.mxu0 0
    %206 = vmatpush.bf16.xpose.msra.mxu0 0
    %207 = vmatpush.bf16.xpose.msra.mxu0 %v186
    %208 = vmatmul.bf16.gmra.mxu0 %v184
    %v209 = vpop.f32.mrf.mxu0
    %v210 = vadd.f32 0.0, %v209
    %v211 = vpop.f32.mrf.mxu0
    %212 = vdwg.mxu0
    %v213 = vmul.f32 %v197, 0.0078125
    %v214 = vmul.f32 %v210, 0.0078125
    %vm215 = vcmask 64512
    %v216 = vsel %vm215, %v213, -inf
    %217 = vmax.xlane.f32.xlu0 %v216
    %v218 = vpop.xlane.xlu0 %217
    %v219 = vsel %vm215, %v214, -inf
    %220 = vmax.xlane.f32.xlu0 %v219
    %v221 = vpop.xlane.xlu0 %220
    %v222 = vrot.slane %v218, 4
    %v223 = vmax.f32 %v218, %v222
    %v224 = vrot.slane %v223, 2
    %v225 = vmax.f32 %v223, %v224
    %v226 = vrot.slane %v225, 1
    %v227 = vmax.f32 %v225, %v226
    %v228 = vrot.slane %v221, 4
    %v229 = vmax.f32 %v221, %v228
    %v230 = vrot.slane %v229, 2
    %v231 = vmax.f32 %v229, %v230
    %v232 = vrot.slane %v231, 1
    %v233 = vmax.f32 %v231, %v232
    %v234 = vsub.f32 %v213, %v227
    %v235 = vsub.f32 %v214, %v233
    %v236 = vmul.f32 %v234, 1.442695
    %v237 = vpow.pop %v236
    %v238 = vmul.f32 %v235, 1.442695
    %v239 = vpow.pop %v238
    %v240 = vsel %vm215, %v237, 0.0
    %241 = vadd.xlane.f32.xlu0 %v240
    %v242 = vpop.xlane.xlu0 %241
    %v243 = vsel %vm215, %v239, 0.0
    %244 = vadd.xlane.f32.xlu0 %v243
    %v245 = vpop.xlane.xlu0 %244
    %v246 = vrot.slane %v242, 4
    %v247 = vadd.f32 %v242, %v246
    %v248 = vrot.slane %v247, 2
    %v249 = vadd.f32 %v247, %v248
    %v250 = vrot.slane %v249, 1
    %v251 = vadd.f32 %v249, %v250
    %v252 = vrot.slane %v245, 4
    %v253 = vadd.f32 %v245, %v252
    %v254 = vrot.slane %v253, 2
    %v255 = vadd.f32 %v253, %v254
    %v256 = vrot.slane %v255, 1
    %v257 = vadd.f32 %v255, %v256
    %v258 = vrcp.pop %v251
    %v259 = vmul.f32 %v251, %v258
    %v260 = vsub.f32 1.0, %v259
    %v261 = vmul.f32 %v258, %v260
    %v262 = vadd.f32 %v258, %v261
    %vm263 = vweird.f32 %v251
    %vm264 = vweird.f32 %v258
    %vm265 = vmor %vm263, %vm264
    %v266 = vsel %vm265, %v258, %v262
    %v267 = vand.u32 2147483647, %v251
    %vm268 = vcmp.eq.f32.partialorder %v267, 8.507059e+37
    %v269 = vand.u32 %v251, 2147483648
    %v270 = vor.u32 1.1754944e-38, %v269
    %v271 = vsel %vm268, %v270, %v266
    %v272 = vmul.f32 %v237, %v271
    %v273 = vrcp.pop %v257
    %v274 = vmul.f32 %v257, %v273
    %v275 = vsub.f32 1.0, %v274
    %v276 = vmul.f32 %v273, %v275
    %v277 = vadd.f32 %v273, %v276
    %vm278 = vweird.f32 %v257
    %vm279 = vweird.f32 %v273
    %vm280 = vmor %vm278, %vm279
    %v281 = vsel %vm280, %v273, %v277
    %v282 = vand.u32 2147483647, %v257
    %vm283 = vcmp.eq.f32.partialorder %v282, 8.507059e+37
    %v284 = vand.u32 %v257, 2147483648
    %v285 = vor.u32 1.1754944e-38, %v284
    %v286 = vsel %vm283, %v285, %v281
    %v287 = vmul.f32 %v239, %v286
    %v288 = vsel %vm215, %v272, 0.0
    %v289 = vrot.slane %v288, 4
    %v290 = vadd.f32 %v288, %v289
    %v291 = vrot.slane %v290, 2
    %v292 = vadd.f32 %v290, %v291
    %v293 = vrot.slane %v292, 1
    %v294 = vadd.f32 %v292, %v293
    %v295 = vsel %vm215, %v287, 0.0
    %v296 = vrot.slane %v295, 4
    %v297 = vadd.f32 %v295, %v296
    %v298 = vrot.slane %v297, 2
    %v299 = vadd.f32 %v297, %v298
    %v300 = vrot.slane %v299, 1
    %v301 = vadd.f32 %v299, %v300
    %302 = vadd.xlane.f32.xlu0 %v288
    %v303 = vpop.xlane.xlu0 %302
    %304 = vadd.xlane.f32.xlu0 %v295
    %v305 = vpop.xlane.xlu0 %304
    %v306 = vld [vmem:[#allocation8] sm:$0xff]
    %v307 = vld [vmem:[#allocation8 + $0x8] sm:$0xff]
    %v308 = vld [vmem:[#allocation10] sm:$0xff]
    %v309 = vld [vmem:[#allocation10 + $0x8] sm:$0xff]
    %v310 = vlaneseq
    %v311 = vshrl.u32 %v310, 7
    %313 = vset.pattern.permute.xlu0 %v311
    %314 = vperm.xlu0 %313, %v294
    %v315 = vpop.permute.xlu0 %314
    %v316 = vlaneseq
    %v317 = vshrl.u32 %v316, 7
    %319 = vset.pattern.permute.xlu0 %v317
    %320 = vperm.xlu0 %319, %v301
    %v321 = vpop.permute.xlu0 %320
    %v322 = vmul.f32 %v306, %v315
    %v323 = vmul.f32 %v307, %v321
    %v324 = vmul.f32 %v308, %v303
    %v325 = vmul.f32 %v309, %v305
    %v326 = vadd.f32 %v322, %v324
    %v327 = vadd.f32 %v323, %v325
    %v328 = vsel %vm142, %v326, 0.0
    %v329 = vrot.slane %v328, 4
    %v330 = vadd.f32 %v328, %v329
    %v331 = vrot.slane %v330, 2
    %v332 = vadd.f32 %v330, %v331
    %v333 = vrot.slane %v332, 1
    %v334 = vadd.f32 %v332, %v333
    %v335 = vsel %vm142, %v327, 0.0
    %v336 = vrot.slane %v335, 4
    %v337 = vadd.f32 %v335, %v336
    %v338 = vrot.slane %v337, 2
    %v339 = vadd.f32 %v337, %v338
    %v340 = vrot.slane %v339, 1
    %v341 = vadd.f32 %v339, %v340
    %vm344 = vcmask 1041409
    %v345 = vsel %vm344, %v341, %v334
    %vm347 = vcmask 254976
    %348 = vst.msk [vmem:[#allocation11] sm:$0x3] %vm347, %v345
    // Predicated region
    $region42: #{tpu_custom_call.1} parent=1 // pred_check
      _
    $region43: #{tpu_custom_call.1} parent=1 // pred_check_branch
      %350 = sbr.rel (0) target = $region45
    $region44: #{tpu_custom_call.1} parent=1 // pred_region
      %352 = vsyncadd [#allocation4], 0
      %s354 = sshll.u32 [#allocation11], 4
      %s355 = int_to_ptr.vmem [resolvable:$true] %s354
      %s356 = sshll.u32 %s5, 4
      %s357 = int_to_ptr.hbm [resolvable:$true] %s356
      %359 = dma.vmem_to_hbm [thread:$0]  %s355, 32, %s357, [#allocation4]
    $region45: #{tpu_custom_call.1} parent=1 // pred_fallthru
      _
    // Predicated region
    $region46: #{tpu_custom_call.1} parent=1 // pred_check
      _
    $region47: #{tpu_custom_call.1} parent=1 // pred_check_branch
      %361 = sbr.rel (0) target = $region49
    $region48: #{tpu_custom_call.1} parent=1 // pred_region
      %363 = dma.done [#allocation4], 32
    $region49: #{tpu_custom_call.1} parent=1 // pred_fallthru
      _
    %364 = vsyncpa [#allocation3], 1
    %365 = vsyncpa [#allocation6], 1
    %366 = vsyncpa [#allocation9], 1
    %367 = vsyncpa [#allocation4], 1

</llo_original>
